<compile_context>
chip_gen: v6e
topology: v6e:2x2x1
jax: 0.10.0
libtpu: 0.0.40
codegen_flags: <defaults>
</compile_context>

<pallas_src>
import functools

import jax
import jax.numpy as jnp
from jax.experimental import pallas as pl
from jax.experimental.pallas import tpu as pltpu

GEM_P = 3.0
GEM_EPS = 1e-6


def _round_up(x, m):
    return ((x + m - 1) // m) * m


# ----------------------------------------------------------------------------
# Fused kernel: local/attention 1x1 convs + lane-resident GeM partial sums
# ----------------------------------------------------------------------------
def _fused_delg_kernel(feat_ref, wcat_ref, bcat_ref,
                       local_ref, attn_ref, attended_ref, pooled_ref,
                       acc_ref, *, local_dim, attn_row, inv_hw, n_lane_chunks):
    t = pl.program_id(2)

    # Feature tile (C, thw): DMA'd HBM->VMEM once, feeds both branches.
    x = feat_ref[0]

    # ---- fused local + attention 1x1 conv: one MXU matmul (bf16 in, f32 acc)
    # wcat rows [0:local_dim] = local_conv weight, row [attn_row] = attention
    # weight (sublane-aligned), remaining rows are zero padding.
    y = jnp.dot(wcat_ref[...], x, preferred_element_type=jnp.float32) + bcat_ref[...]
    local = y[:local_dim, :]                                          # (L, thw)
    attn = jax.nn.sigmoid(y[attn_row:attn_row + 1, :])                # (1, thw)
    attended = local * attn
    local_ref[0] = local.astype(local_ref.dtype)
    attn_ref[0] = attn.astype(attn_ref.dtype)
    attended_ref[0] = attended.astype(attended_ref.dtype)

    # ---- GeM partial sums: clamp + cube in f32 on the VPU, accumulated into a
    # lane-resident (C, 128) scratch with pure VPU adds (no per-tile XLU reduce)
    @pl.when(t == 0)
    def _init():
        acc_ref[...] = jnp.zeros_like(acc_ref)

    part = None
    for j in range(n_lane_chunks):                       # static, lane-aligned
        xj = x[:, j * 128:(j + 1) * 128].astype(jnp.float32)
        xj = jnp.maximum(xj, GEM_EPS)
        cj = xj * xj * xj
        part = cj if part is None else part + cj
    acc_ref[...] += part

    # ---- per-image finalize: single cross-lane reduce, once per image.
    # (Lane-dense (1, C) emission is possible via a transposed matvec, but the
    #  write is C floats once per image -> negligible; keep the proven layout.)
    @pl.when(t == pl.num_programs(2) - 1)
    def _finalize():
        pooled_col = jnp.sum(acc_ref[...], axis=-1, keepdims=True) * inv_hw  # (C,1)
        pooled_ref[0, 0] = pooled_col


# ----------------------------------------------------------------------------
# Wrapper (eval-mode DELGModel.forward + extract_features dict)
# ----------------------------------------------------------------------------
def delg_forward(x_nchw, params, *, compute_dtype=jnp.bfloat16, max_tile=None):
    """Returns ((None, logits), features) matching the PyTorch eval forward."""
    B, C, H, W = x_nchw.shape
    HW = H * W

    feat = x_nchw.reshape(B, C, HW)          # free reshape, stays channels-first
    if feat.dtype != compute_dtype:
        # TODO(synk): in a full pipeline the backbone should emit compute_dtype
        # directly so this cast (an extra HBM pass) disappears.
        feat = feat.astype(compute_dtype)

    wl, bl = params["wl"], params["bl"]
    wa, ba = params["wa"], params["ba"]
    wg, bg = params["wg"], params["bg"]
    wc, bc = params["wc"], params["bc"]
    local_dim = wl.shape[0]

    # Pack local + attention 1x1-conv weights into one matrix; the attention
    # row sits at a sublane-aligned offset so both result slices are free.
    attn_row = _round_up(local_dim, 8)
    ld_pad = attn_row + 8
    wcat = (jnp.zeros((ld_pad, C), compute_dtype)
            .at[:local_dim].set(wl.astype(compute_dtype))
            .at[attn_row].set(wa[0].astype(compute_dtype)))
    bcat = (jnp.zeros((ld_pad, 1), jnp.float32)
            .at[:local_dim].set(bl.astype(jnp.float32))
            .at[attn_row].set(ba[0].astype(jnp.float32)))

    # ---- generation-aware tiling / VMEM budget -------------------------------
    try:
        vmem_cap = int(pltpu.get_tpu_info().vmem_capacity_bytes)
    except Exception:
        vmem_cap = 64 << 20                       # conservative (v7x per-core)
    vmem_hi = (vmem_cap * 3) // 4                 # leave compiler headroom

    io_bytes = jnp.dtype(compute_dtype).itemsize

    def vmem_est(thw_):
        feat_tile = C * thw_ * io_bytes * 2                      # double buffered
        out_tiles = (2 * local_dim + 1) * thw_ * io_bytes * 2    # double buffered
        temps = 2 * ld_pad * thw_ * 4                            # f32 matmul temps
        weights = ld_pad * C * io_bytes + ld_pad * 4             # single buffered
        acc = C * 128 * 4
        return feat_tile + out_tiles + temps + weights + acc + (8 << 20)

    if max_tile is None:
        max_tile = 2048 if vmem_cap >= (96 << 20) else 1024
    max_tile = _round_up(max_tile, 128)

    hw_pad0 = _round_up(HW, 128)                  # lane-dense spatial extent
    thw = min(max_tile, hw_pad0)
    while thw > 128 and vmem_est(thw) > vmem_hi:
        thw -= 128
    n_t = pl.cdiv(hw_pad0, thw)

    # v7x megacore: B is the only parallel axis, so B == 1 would idle one core.
    # Split the spatial axis across cores instead; partial GeM sums are
    # combined in the wrapper.  No effect on single-core chips.
    n_split = 1
    if B == 1 and n_t == 1 and thw >= 256:
        thw //= 2
        n_t = 2
    if B == 1 and n_t % 2 == 0:
        n_split = 2
    n_t_inner = n_t // n_split
    hw_pad = n_t * thw

    if hw_pad != HW:
        # zero-pad; clamp makes each pad element contribute eps^3 (~1e-18) to
        # the GeM sum while inv_hw stays 1/HW -> negligible bias.
        feat = jnp.pad(feat, ((0, 0), (0, 0), (0, hw_pad - HW)))

    vmem_limit = int(min(max(vmem_est(thw), 16 << 20), vmem_hi))

    def _const_spec(shape):
        idx = lambda c, b, t: (0,) * len(shape)
        try:
            # Constant blocks never change index: one VMEM copy is enough.
            return pl.BlockSpec(shape, idx, pipeline_mode=pl.Buffered(1))
        except TypeError:
            return pl.BlockSpec(shape, idx)

    spatial_idx = lambda c, b, t: (b, 0, c * n_t_inner + t)

    kernel = functools.partial(
        _fused_delg_kernel, local_dim=local_dim, attn_row=attn_row,
        inv_hw=1.0 / HW, n_lane_chunks=thw // 128)

    local, attn, attended, pooled_part = pl.pallas_call(
        kernel,
        grid=(n_split, B, n_t_inner),
        out_shape=(
            jax.ShapeDtypeStruct((B, local_dim, hw_pad), compute_dtype),  # local
            jax.ShapeDtypeStruct((B, 1, hw_pad), compute_dtype),          # attention
            jax.ShapeDtypeStruct((B, local_dim, hw_pad), compute_dtype),  # attended
            jax.ShapeDtypeStruct((B, n_split, C, 1), jnp.float32),        # GeM sums
        ),
        in_specs=[
            pl.BlockSpec((1, C, thw), spatial_idx),     # feature-map tile
            _const_spec((ld_pad, C)),                   # packed conv weights
            _const_spec((ld_pad, 1)),                   # packed conv biases
        ],
        out_specs=(
            pl.BlockSpec((1, local_dim, thw), spatial_idx),
            pl.BlockSpec((1, 1, thw), spatial_idx),
            pl.BlockSpec((1, local_dim, thw), spatial_idx),
            pl.BlockSpec((1, 1, C, 1), lambda c, b, t: (b, c, 0, 0)),
        ),
        scratch_shapes=[pltpu.VMEM((C, 128), jnp.float32)],   # lane-resident acc
        compiler_params=pltpu.CompilerParams(
            dimension_semantics=("parallel", "parallel", "arbitrary"),
            vmem_limit_bytes=vmem_limit),
    )(feat, wcat, bcat)

    # ---- global head (hoisted out of the kernel, tiny XLA matmuls) -----------
    hi = jax.lax.Precision.HIGHEST
    pooled = jnp.sum(pooled_part[..., 0], axis=1)                   # (B, C) mean of cubes
    gem = pooled ** (1.0 / GEM_P)                                   # GeM root
    gfeat = jnp.dot(gem, wg.T, precision=hi) + bg.reshape(1, -1)    # global_proj
    logits = jnp.dot(gfeat, wc.T, precision=hi) + bc.reshape(1, -1) # classifier

    if hw_pad != HW:
        local = local[:, :, :HW]
        attn = attn[:, :, :HW]
        attended = attended[:, :, :HW]

    features = {
        "global_features": gfeat,                                   # (B, G) f32
        "local_features": local.reshape(B, local_dim, H, W),        # NCHW bf16
        "attention_map": attn.reshape(B, 1, H, W),
        "attended_local": attended.reshape(B, local_dim, H, W),
    }
    # eval-mode forward: (loss=None, logits)
    # TODO(synk): training-mode CrossEntropyLoss path is not implemented here.
    return (None, logits), features


# ----------------------------------------------------------------------------
# Deterministic parameter init (PyTorch (out, in) weight convention)
# ----------------------------------------------------------------------------
def init_params(key, backbone_dim, global_dim, local_dim, num_classes):
    ks = jax.random.split(key, 8)
    s = 0.05
    return {
        "wg": s * jax.random.normal(ks[0], (global_dim, backbone_dim), jnp.float32),
        "bg": s * jax.random.normal(ks[1], (global_dim, 1), jnp.float32),
        "wc": s * jax.random.normal(ks[2], (num_classes, global_dim), jnp.float32),
        "bc": s * jax.random.normal(ks[3], (num_classes, 1), jnp.float32),
        "wl": s * jax.random.normal(ks[4], (local_dim, backbone_dim), jnp.float32),
        "bl": s * jax.random.normal(ks[5], (local_dim, 1), jnp.float32),
        "wa": s * jax.random.normal(ks[6], (1, backbone_dim), jnp.float32),
        "ba": s * jax.random.normal(ks[7], (1, 1), jnp.float32),
    }


# ----------------------------------------------------------------------------
# Pure-JAX reference (mirrors the PyTorch math on the bf16-quantized inputs)
# ----------------------------------------------------------------------------
def reference_forward(x_nchw, p, compute_dtype=jnp.bfloat16):
    B, C, H, W = x_nchw.shape
    hi = jax.lax.Precision.HIGHEST
    q = lambda a: a.astype(compute_dtype).astype(jnp.float32)
    xf = q(x_nchw.reshape(B, C, H * W))
    pooled = jnp.mean(jnp.maximum(xf, GEM_EPS) ** GEM_P, axis=-1)          # (B, C)
    gem = pooled ** (1.0 / GEM_P)
    g = jnp.dot(gem, p["wg"].T, precision=hi) + p["bg"][:, 0]
    logits = jnp.dot(g, p["wc"].T, precision=hi) + p["bc"][:, 0]
    local = jnp.einsum("lc,bcs->bls", q(p["wl"]), xf, precision=hi) + p["bl"][None]
    attn = jax.nn.sigmoid(jnp.einsum("ac,bcs->bas", q(p["wa"]), xf, precision=hi)
                          + p["ba"][None])
    attended = local * attn
    return (logits, g,
            local.reshape(B, -1, H, W),
            attn.reshape(B, 1, H, W),
            attended.reshape(B, -1, H, W))


if __name__ == "__main__":
    key = jax.random.PRNGKey(0)
    kx, kp = jax.random.split(key)

    backbone_dim, global_dim, local_dim, num_classes = 32, 16, 16, 10
    params = init_params(kp, backbone_dim, global_dim, local_dim, num_classes)

    def run_and_check(x, max_tile=None):
        (loss, logits), feats = delg_forward(x, params, max_tile=max_tile)
        jax.block_until_ready(logits)
        jax.block_until_ready(feats["attended_local"])

        ref_logits, ref_g, ref_local, ref_attn, ref_attended = reference_forward(x, params)
        f32 = lambda a: a.astype(jnp.float32)
        assert loss is None
        assert jnp.allclose(logits, ref_logits, atol=2e-3, rtol=2e-3)
        assert jnp.allclose(feats["global_features"], ref_g, atol=2e-3, rtol=2e-3)
        # local/attn/attended are stored in bf16 -> wider tolerance.
        assert jnp.allclose(f32(feats["local_features"]), ref_local, atol=2e-2, rtol=2e-2)
        assert jnp.allclose(f32(feats["attention_map"]), ref_attn, atol=2e-2, rtol=2e-2)
        assert jnp.allclose(f32(feats["attended_local"]), ref_attended, atol=2e-2, rtol=2e-2)

    # (a) ragged spatial size -> zero-padded to a lane-dense tile
    x_a = jax.random.normal(kx, (2, backbone_dim, 9, 9), jnp.float32)
    run_and_check(x_a)
    # (b) multi-tile spatial reduction (forced small tile)
    x_b = jax.random.normal(kx, (2, backbone_dim, 16, 16), jnp.float32)
    run_and_check(x_b, max_tile=128)
    # (c) batch-1 path: spatial axis split across TensorCores (v7x megacore)
    x_c = jax.random.normal(kx, (1, backbone_dim, 16, 16), jnp.float32)
    run_and_check(x_c, max_tile=128)

    print("KERNEL_OK")
</pallas_src>

<mosaic_0001>
module attributes {stable_mosaic.version = 11 : i64} {
  func.func @_fused_delg_kernel(%arg0: i32, %arg1: i32, %arg2: i32, %arg3: memref<1x32x128xbf16, #tpu.memory_space<vmem>>, %arg4: memref<24x32xbf16, #tpu.memory_space<vmem>>, %arg5: memref<24x1xf32, #tpu.memory_space<vmem>>, %arg6: memref<1x16x128xbf16, #tpu.memory_space<vmem>>, %arg7: memref<1x1x128xbf16, #tpu.memory_space<vmem>>, %arg8: memref<1x16x128xbf16, #tpu.memory_space<vmem>>, %arg9: memref<1x1x32x1xf32, #tpu.memory_space<vmem>>, %arg10: memref<32x128xf32, #tpu.memory_space<vmem>>) attributes {dimension_semantics = [#tpu.dimension_semantics<parallel>, #tpu.dimension_semantics<parallel>, #tpu.dimension_semantics<arbitrary>], iteration_bounds = array<i64: 1, 2, 1>, scalar_prefetch = 0 : i64, scratch_operands = 1 : i64, tpu.core_type = #tpu.core_type<tc>, window_params = [{transform_indices = @transform_0, window_bounds = array<i64: 1, 32, 128>}, {pipeline_mode = #tpu.pipeline_mode<synchronous>, transform_indices = @transform_1, window_bounds = array<i64: 24, 32>}, {pipeline_mode = #tpu.pipeline_mode<synchronous>, transform_indices = @transform_2, window_bounds = array<i64: 24, 1>}, {transform_indices = @transform_3, window_bounds = array<i64: 1, 16, 128>}, {transform_indices = @transform_4, window_bounds = array<i64: 1, 1, 128>}, {transform_indices = @transform_5, window_bounds = array<i64: 1, 16, 128>}, {transform_indices = @transform_6, window_bounds = array<i64: 1, 1, 32, 1>}]} {
    %c0 = arith.constant 0 : index
    %c0_0 = arith.constant 0 : index
    %c0_1 = arith.constant 0 : index
    %0 = vector.load %arg3[%c0, %c0_0, %c0_1] : memref<1x32x128xbf16, #tpu.memory_space<vmem>>, vector<1x32x128xbf16>
    %1 = vector.shape_cast %0 : vector<1x32x128xbf16> to vector<32x128xbf16>
    %c0_2 = arith.constant 0 : index
    %c0_3 = arith.constant 0 : index
    %2 = vector.load %arg4[%c0_2, %c0_3] : memref<24x32xbf16, #tpu.memory_space<vmem>>, vector<24x32xbf16>
    %cst = arith.constant dense<0.000000e+00> : vector<24x128xf32>
    %3 = tpu.matmul %2, %1, %cst {dimension_numbers = #tpu.dot_dimension_numbers<[1], [0], [0], [1], [0, 0, 1, 1], [], []>} : vector<24x32xbf16>, vector<32x128xbf16>, vector<24x128xf32> -> vector<24x128xf32>
    %c0_4 = arith.constant 0 : index
    %c0_5 = arith.constant 0 : index
    %4 = vector.load %arg5[%c0_4, %c0_5] : memref<24x1xf32, #tpu.memory_space<vmem>>, vector<24x1xf32>
    %5 = vector.broadcast %4 : vector<24x1xf32> to vector<24x128xf32>
    %6 = arith.addf %3, %5 : vector<24x128xf32>
    %7 = vector.extract_strided_slice %6 {offsets = [0, 0], sizes = [16, 128], strides = [1, 1]} : vector<24x128xf32> to vector<16x128xf32>
    %8 = vector.extract_strided_slice %6 {offsets = [16, 0], sizes = [1, 128], strides = [1, 1]} : vector<24x128xf32> to vector<1x128xf32>
    %9 = arith.negf %8 : vector<1x128xf32>
    %10 = math.exp %9 : vector<1x128xf32>
    %cst_6 = arith.constant 1.000000e+00 : f32
    %11 = vector.broadcast %cst_6 : f32 to vector<1x128xf32>
    %12 = arith.addf %11, %10 : vector<1x128xf32>
    %13 = arith.divf %11, %12 : vector<1x128xf32>
    %14 = vector.broadcast %13 : vector<1x128xf32> to vector<16x128xf32>
    %15 = arith.mulf %7, %14 : vector<16x128xf32>
    %16 = arith.truncf %7 : vector<16x128xf32> to vector<16x128xbf16>
    %c0_7 = arith.constant 0 : index
    %c0_8 = arith.constant 0 : index
    %c0_9 = arith.constant 0 : index
    %17 = vector.load %arg6[%c0_7, %c0_8, %c0_9] : memref<1x16x128xbf16, #tpu.memory_space<vmem>>, vector<1x16x128xbf16>
    %18 = vector.shape_cast %17 : vector<1x16x128xbf16> to vector<16x128xbf16>
    %19 = vector.shape_cast %16 : vector<16x128xbf16> to vector<1x16x128xbf16>
    tpu.vector_store %arg6[%c0_7, %c0_8, %c0_9], %19 {strides = array<i32>} : memref<1x16x128xbf16, #tpu.memory_space<vmem>>, vector<1x16x128xbf16>,
    %20 = arith.truncf %13 : vector<1x128xf32> to vector<1x128xbf16>
    %c0_10 = arith.constant 0 : index
    %c0_11 = arith.constant 0 : index
    %c0_12 = arith.constant 0 : index
    %21 = vector.load %arg7[%c0_10, %c0_11, %c0_12] : memref<1x1x128xbf16, #tpu.memory_space<vmem>>, vector<1x1x128xbf16>
    %22 = vector.shape_cast %21 : vector<1x1x128xbf16> to vector<1x128xbf16>
    %23 = vector.shape_cast %20 : vector<1x128xbf16> to vector<1x1x128xbf16>
    tpu.vector_store %arg7[%c0_10, %c0_11, %c0_12], %23 {strides = array<i32>} : memref<1x1x128xbf16, #tpu.memory_space<vmem>>, vector<1x1x128xbf16>,
    %24 = arith.truncf %15 : vector<16x128xf32> to vector<16x128xbf16>
    %c0_13 = arith.constant 0 : index
    %c0_14 = arith.constant 0 : index
    %c0_15 = arith.constant 0 : index
    %25 = vector.load %arg8[%c0_13, %c0_14, %c0_15] : memref<1x16x128xbf16, #tpu.memory_space<vmem>>, vector<1x16x128xbf16>
    %26 = vector.shape_cast %25 : vector<1x16x128xbf16> to vector<16x128xbf16>
    %27 = vector.shape_cast %24 : vector<16x128xbf16> to vector<1x16x128xbf16>
    tpu.vector_store %arg8[%c0_13, %c0_14, %c0_15], %27 {strides = array<i32>} : memref<1x16x128xbf16, #tpu.memory_space<vmem>>, vector<1x16x128xbf16>,
    %c0_i32 = arith.constant 0 : i32
    %28 = arith.cmpi eq, %arg2, %c0_i32 : i32
    %29 = arith.extui %28 : i1 to i32
    %c0_i32_16 = arith.constant 0 : i32
    %30 = arith.cmpi ne, %29, %c0_i32_16 : i32
    scf.if %30 {
      %cst_24 = arith.constant 0.000000e+00 : f32
      %42 = vector.broadcast %cst_24 : f32 to vector<32x128xf32>
      %c0_25 = arith.constant 0 : index
      %c0_26 = arith.constant 0 : index
      %43 = vector.load %arg10[%c0_25, %c0_26] : memref<32x128xf32, #tpu.memory_space<vmem>>, vector<32x128xf32>
      tpu.vector_store %arg10[%c0_25, %c0_26], %42 {strides = array<i32>} : memref<32x128xf32, #tpu.memory_space<vmem>>, vector<32x128xf32>,
    } else {
    }
    %31 = arith.extf %1 : vector<32x128xbf16> to vector<32x128xf32>
    %cst_17 = arith.constant 9.99999997E-7 : f32
    %32 = vector.broadcast %cst_17 : f32 to vector<32x128xf32>
    %33 = arith.maximumf %31, %32 : vector<32x128xf32>
    %34 = arith.mulf %33, %33 : vector<32x128xf32>
    %35 = arith.mulf %34, %33 : vector<32x128xf32>
    %c0_18 = arith.constant 0 : index
    %c0_19 = arith.constant 0 : index
    %36 = vector.load %arg10[%c0_18, %c0_19] : memref<32x128xf32, #tpu.memory_space<vmem>>, vector<32x128xf32>
    %37 = arith.addf %36, %35 : vector<32x128xf32>
    %c0_20 = arith.constant 0 : index
    %c0_21 = arith.constant 0 : index
    %38 = vector.load %arg10[%c0_20, %c0_21] : memref<32x128xf32, #tpu.memory_space<vmem>>, vector<32x128xf32>
    tpu.vector_store %arg10[%c0_20, %c0_21], %37 {strides = array<i32>} : memref<32x128xf32, #tpu.memory_space<vmem>>, vector<32x128xf32>,
    %c0_i32_22 = arith.constant 0 : i32
    %39 = arith.cmpi eq, %arg2, %c0_i32_22 : i32
    %40 = arith.extui %39 : i1 to i32
    %c0_i32_23 = arith.constant 0 : i32
    %41 = arith.cmpi ne, %40, %c0_i32_23 : i32
    scf.if %41 {
      %c0_24 = arith.constant 0 : index
      %c0_25 = arith.constant 0 : index
      %42 = vector.load %arg10[%c0_24, %c0_25] : memref<32x128xf32, #tpu.memory_space<vmem>>, vector<32x128xf32>
      %cst_26 = arith.constant dense<0.000000e+00> : vector<32xf32>
      %43 = vector.multi_reduction <add>, %42, %cst_26 [1] : vector<32x128xf32> to vector<32xf32>
      %44 = vector.shape_cast %43 : vector<32xf32> to vector<32x1xf32>
      %cst_27 = arith.constant 0.0123456791 : f32
      %45 = vector.broadcast %cst_27 : f32 to vector<32x1xf32>
      %46 = arith.mulf %44, %45 : vector<32x1xf32>
      %c0_28 = arith.constant 0 : index
      %c0_29 = arith.constant 0 : index
      %c0_30 = arith.constant 0 : index
      %c0_31 = arith.constant 0 : index
      %47 = vector.load %arg9[%c0_28, %c0_29, %c0_30, %c0_31] : memref<1x1x32x1xf32, #tpu.memory_space<vmem>>, vector<1x1x32x1xf32>
      %48 = vector.shape_cast %47 : vector<1x1x32x1xf32> to vector<32x1xf32>
      %49 = vector.shape_cast %46 : vector<32x1xf32> to vector<1x1x32x1xf32>
      tpu.vector_store %arg9[%c0_28, %c0_29, %c0_30, %c0_31], %49 {strides = array<i32>} : memref<1x1x32x1xf32, #tpu.memory_space<vmem>>, vector<1x1x32x1xf32>,
    } else {
    }
    return
  }
  func.func @transform_0(%arg0: i32, %arg1: i32, %arg2: i32) -> (i32, i32, i32) {
    %c1_i32 = arith.constant 1 : i32
    %0 = arith.muli %arg0, %c1_i32 : i32
    %1 = arith.addi %0, %arg2 : i32
    %c0_i32 = arith.constant 0 : i32
    %c0_i32_0 = arith.constant 0 : i32
    return %arg1, %c0_i32, %1 : i32, i32, i32
  }
  func.func @transform_1(%arg0: i32, %arg1: i32, %arg2: i32) -> (i32, i32) {
    %c0_i32 = arith.constant 0 : i32
    %c0_i32_0 = arith.constant 0 : i32
    %c0_i32_1 = arith.constant 0 : i32
    return %c0_i32, %c0_i32_0 : i32, i32
  }
  func.func @transform_2(%arg0: i32, %arg1: i32, %arg2: i32) -> (i32, i32) {
    %c0_i32 = arith.constant 0 : i32
    %c0_i32_0 = arith.constant 0 : i32
    %c0_i32_1 = arith.constant 0 : i32
    return %c0_i32, %c0_i32_0 : i32, i32
  }
  func.func @transform_3(%arg0: i32, %arg1: i32, %arg2: i32) -> (i32, i32, i32) {
    %c1_i32 = arith.constant 1 : i32
    %0 = arith.muli %arg0, %c1_i32 : i32
    %1 = arith.addi %0, %arg2 : i32
    %c0_i32 = arith.constant 0 : i32
    %c0_i32_0 = arith.constant 0 : i32
    return %arg1, %c0_i32, %1 : i32, i32, i32
  }
  func.func @transform_4(%arg0: i32, %arg1: i32, %arg2: i32) -> (i32, i32, i32) {
    %c1_i32 = arith.constant 1 : i32
    %0 = arith.muli %arg0, %c1_i32 : i32
    %1 = arith.addi %0, %arg2 : i32
    %c0_i32 = arith.constant 0 : i32
    %c0_i32_0 = arith.constant 0 : i32
    return %arg1, %c0_i32, %1 : i32, i32, i32
  }
  func.func @transform_5(%arg0: i32, %arg1: i32, %arg2: i32) -> (i32, i32, i32) {
    %c1_i32 = arith.constant 1 : i32
    %0 = arith.muli %arg0, %c1_i32 : i32
    %1 = arith.addi %0, %arg2 : i32
    %c0_i32 = arith.constant 0 : i32
    %c0_i32_0 = arith.constant 0 : i32
    return %arg1, %c0_i32, %1 : i32, i32, i32
  }
  func.func @transform_6(%arg0: i32, %arg1: i32, %arg2: i32) -> (i32, i32, i32, i32) {
    %c0_i32 = arith.constant 0 : i32
    %c0_i32_0 = arith.constant 0 : i32
    %c0_i32_1 = arith.constant 0 : i32
    return %arg1, %arg0, %c0_i32, %c0_i32_0 : i32, i32, i32, i32
  }
}

</mosaic_0001>

<llo_original>
// kernel: tpu_custom_call.1
$region0: #{tpu_custom_call.1}
  #allocation0 [shape = 'u32[]', space=smem, size = 0x4, offset = 0x4, fixed_abs, tag = 'smem constant byte address 0x4 - core index']
  #allocation1 [shape = 'u32[144,128]{1,0:T(1,128)}', space=vmem, size = 0x12000, scoped, tag = 'internal scratch']
  #allocation2 [shape = 'f32[32,128]{1,0:T(8,128)}', space=vmem, size = 0x4000, scoped, tag = 'scratch operand']
  %s0 = inlined_call_operand.hbm [shape: bf16[2,32,128], index: 0, kind: input, shape index: {}]
  %s1 = inlined_call_operand.vmem [shape: bf16[24,32], index: 1, kind: input, shape index: {}]
  %s2 = inlined_call_operand.vmem [shape: f32[24,1], index: 2, kind: input, shape index: {}]
  %s3 = inlined_call_operand.hbm [shape: bf16[2,16,128], index: 3, kind: output, shape index: {0}]
  %s4 = inlined_call_operand.vmem [shape: bf16[2,1,128], index: 4, kind: output, shape index: {1}]
  %s5 = inlined_call_operand.hbm [shape: bf16[2,16,128], index: 5, kind: output, shape index: {2}]
  %s6 = inlined_call_operand.vmem [shape: f32[2,1,32,1], index: 6, kind: output, shape index: {3}]
  %7 = xla_tuple %s3, %s4, %s5, %s6
  %s8 = sld [smem:[#allocation0]]
  $region81: #{tpu_custom_call.1} parent=0
    _
  %s10 = ssub.s32 1, %s8
  %s11 = scalar_select 0, %s10, %s8
  $region1: #{tpu_custom_call.1} parent=0
    #allocation3 [shape = 'u8[16384]{0}', space=vmem, size = 0x4000, scoped, tag = 'input window, operand 0']
    #allocation4 [shape = 's32[2]{0}', space=sflag, size = 0x8, scoped, tag = 'scoped memory for tpu_custom_call.1']
    #allocation5 [shape = 's32[2]{0}', space=sflag, size = 0x8, scoped, tag = 'scoped memory for tpu_custom_call.1']
    #allocation6 [shape = 'u8[8192]{0}', space=vmem, size = 0x2000, scoped, tag = 'output window, operand 0']
    #allocation7 [shape = 'u8[8192]{0}', space=vmem, size = 0x2000, scoped, tag = 'output window, operand 2']
    #allocation8 [shape = 's32[2]{0}', space=sflag, size = 0x8, scoped, tag = 'scoped memory for tpu_custom_call.1']
    %12 = vsyncpa [#allocation4], 0
    %s13 = scalar_lea.sflag [#allocation4], 1
    %14 = vsyncpa %s13, 0
    %15 = vsyncpa [#allocation5], 0
    %s16 = scalar_lea.sflag [#allocation5], 1
    %17 = vsyncpa %s16, 0
    %18 = vsyncpa [#allocation8], 0
    %s19 = scalar_lea.sflag [#allocation8], 1
    %20 = vsyncpa %s19, 0
    loop: start=0, step=1, limit=4
    $region2: #{tpu_custom_call.1} parent=1 // loop_pre_header
      _
    $region3: #{tpu_custom_call.1} parent=1 // loop_header
      %s22 = sphi 0, %s26
      %p23 = scmp.ge.s32.totalorder %s22, 4
      %s29 = sphi 0, %s48
      %s30 = sphi 0, %s44
      %s31 = sphi 0, %s40
      %s32 = sphi 0, %s29
      %s33 = sphi 0, %s30
      %s34 = sphi 0, %s31
      %s35 = sphi 0, %s32
      %s36 = sphi 0, %s33
      %s37 = sphi 0, %s34
      %s55 = sphi 0, %s57
      %s58 = sphi 0, %s55
      %s59 = sphi 0, %s58
      %s75 = sphi 0, %s59
      %s79 = sphi 0, %s79
      %s81 = sphi 0, %s79
      %s82 = sphi 0, %s81
      %s96 = sphi 0, %s82
      %s100 = sphi 0, %s100
      %s102 = sphi 0, %s100
      %s103 = sphi 0, %s102
      %s117 = sphi 0, %s103
      %s127 = sphi 0, %s129
      %s130 = sphi 0, %s127
      %s131 = sphi 0, %s130
      %s147 = sphi 0, %s131
      %s157 = sphi 0, %s159
      %s160 = sphi 0, %s157
      %s161 = sphi 0, %s160
      %s177 = sphi 0, %s161
      %s187 = sphi 0, %s189
      %s190 = sphi 0, %s187
      %s191 = sphi 0, %s190
      %s207 = sphi 0, %s191
      %s215 = sphi 0, %s217
      %s218 = sphi 0, %s215
      %s219 = sphi 0, %s218
      %s235 = sphi 0, %s219
    $region4: #{tpu_custom_call.1} parent=1 // loop_header_branch
      %25 = sbr.rel (%p23) target = $region8
    $region5: #{tpu_custom_call.1} parent=1 // loop_body
      %s27 = ssub.s32 %s22, 1
      %s28 = ssub.s32 %s22, 2
      %s38 = sadd.s32 1, %s31
      %p39 = scmp.ge.s32.totalorder %s38, 1
      %s40 = scalar_select %p39, 0, %s38
      %s41 = sadd.s32 1, %s30
      %s42 = scalar_select %p39, %s41, %s30
      %p43 = scmp.ge.s32.totalorder %s42, 2
      %s44 = scalar_select %p43, 0, %s42
      %s45 = sadd.s32 1, %s29
      %s46 = scalar_select %p43, %s45, %s29
      %p47 = scmp.ge.s32.totalorder %s46, 1
      %s48 = scalar_select %p47, 0, %s46
      %s49 = sadd.s32 %s29, %s31
      %s50 = sadd.s32 %s48, %s40
      %s51 = ssub.s32 %s30, %s44
      %s52 = ssub.s32 %s49, %s50
      %s53 = sor.u32 %s51, %s52
      %p54 = scmp.eq.s32.totalorder %s53, 0
      %s56 = sadd.s32 %s55, 1
      %s57 = scalar_select %p54, %s55, %s56
      %p60 = pneg %p54
      %p61 = scmp.eq.s32.totalorder %s22, 1
      %p62 = por %p60, %p61
      %p63 = scmp.ne.s32.totalorder %s55, %s58
      %p64 = scmp.eq.s32.totalorder %s22, 0
      %p65 = por %p63, %p64
      %p66 = scmp.ne.s32.totalorder %s55, %s58
      %p67 = scmp.eq.s32.totalorder %s27, 1
      %p68 = por %p66, %p67
      %p69 = scmp.ne.s32.totalorder %s58, %s59
      %p70 = scmp.eq.s32.totalorder %s27, 0
      %p71 = por %p69, %p70
      %p72 = scmp.ne.s32.totalorder %s58, %s59
      %p73 = scmp.eq.s32.totalorder %s28, 1
      %p74 = por %p72, %p73
      %p76 = scmp.ne.s32.totalorder %s59, %s75
      %p77 = scmp.eq.s32.totalorder %s28, 0
      %p78 = por %p76, %p77
      %s80 = sadd.s32 %s79, 1
      %p83 = scmp.eq.s32.totalorder %s22, 1
      %p84 = scmp.ne.s32.totalorder %s79, %s81
      %p85 = scmp.eq.s32.totalorder %s22, 0
      %p86 = por %p84, %p85
      %p87 = scmp.ne.s32.totalorder %s79, %s81
      %p88 = scmp.eq.s32.totalorder %s27, 1
      %p89 = por %p87, %p88
      %p90 = scmp.ne.s32.totalorder %s81, %s82
      %p91 = scmp.eq.s32.totalorder %s27, 0
      %p92 = por %p90, %p91
      %p93 = scmp.ne.s32.totalorder %s81, %s82
      %p94 = scmp.eq.s32.totalorder %s28, 1
      %p95 = por %p93, %p94
      %p97 = scmp.ne.s32.totalorder %s82, %s96
      %p98 = scmp.eq.s32.totalorder %s28, 0
      %p99 = por %p97, %p98
      %s101 = sadd.s32 %s100, 1
      %p104 = scmp.eq.s32.totalorder %s22, 1
      %p105 = scmp.ne.s32.totalorder %s100, %s102
      %p106 = scmp.eq.s32.totalorder %s22, 0
      %p107 = por %p105, %p106
      %p108 = scmp.ne.s32.totalorder %s100, %s102
      %p109 = scmp.eq.s32.totalorder %s27, 1
      %p110 = por %p108, %p109
      %p111 = scmp.ne.s32.totalorder %s102, %s103
      %p112 = scmp.eq.s32.totalorder %s27, 0
      %p113 = por %p111, %p112
      %p114 = scmp.ne.s32.totalorder %s102, %s103
      %p115 = scmp.eq.s32.totalorder %s28, 1
      %p116 = por %p114, %p115
      %p118 = scmp.ne.s32.totalorder %s103, %s117
      %p119 = scmp.eq.s32.totalorder %s28, 0
      %p120 = por %p118, %p119
      %s121 = sadd.s32 %s29, %s31
      %s122 = sadd.s32 %s48, %s40
      %s123 = ssub.s32 %s30, %s44
      %s124 = ssub.s32 %s121, %s122
      %s125 = sor.u32 %s123, %s124
      %p126 = scmp.eq.s32.totalorder %s125, 0
      %s128 = sadd.s32 %s127, 1
      %s129 = scalar_select %p126, %s127, %s128
      %p132 = pneg %p126
      %p133 = scmp.eq.s32.totalorder %s22, 1
      %p134 = por %p132, %p133
      %p135 = scmp.ne.s32.totalorder %s127, %s130
      %p136 = scmp.eq.s32.totalorder %s22, 0
      %p137 = por %p135, %p136
      %p138 = scmp.ne.s32.totalorder %s127, %s130
      %p139 = scmp.eq.s32.totalorder %s27, 1
      %p140 = por %p138, %p139
      %p141 = scmp.ne.s32.totalorder %s130, %s131
      %p142 = scmp.eq.s32.totalorder %s27, 0
      %p143 = por %p141, %p142
      %p144 = scmp.ne.s32.totalorder %s130, %s131
      %p145 = scmp.eq.s32.totalorder %s28, 1
      %p146 = por %p144, %p145
      %p148 = scmp.ne.s32.totalorder %s131, %s147
      %p149 = scmp.eq.s32.totalorder %s28, 0
      %p150 = por %p148, %p149
      %s151 = sadd.s32 %s29, %s31
      %s152 = sadd.s32 %s48, %s40
      %s153 = ssub.s32 %s30, %s44
      %s154 = ssub.s32 %s151, %s152
      %s155 = sor.u32 %s153, %s154
      %p156 = scmp.eq.s32.totalorder %s155, 0
      %s158 = sadd.s32 %s157, 1
      %s159 = scalar_select %p156, %s157, %s158
      %p162 = pneg %p156
      %p163 = scmp.eq.s32.totalorder %s22, 1
      %p164 = por %p162, %p163
      %p165 = scmp.ne.s32.totalorder %s157, %s160
      %p166 = scmp.eq.s32.totalorder %s22, 0
      %p167 = por %p165, %p166
      %p168 = scmp.ne.s32.totalorder %s157, %s160
      %p169 = scmp.eq.s32.totalorder %s27, 1
      %p170 = por %p168, %p169
      %p171 = scmp.ne.s32.totalorder %s160, %s161
      %p172 = scmp.eq.s32.totalorder %s27, 0
      %p173 = por %p171, %p172
      %p174 = scmp.ne.s32.totalorder %s160, %s161
      %p175 = scmp.eq.s32.totalorder %s28, 1
      %p176 = por %p174, %p175
      %p178 = scmp.ne.s32.totalorder %s161, %s177
      %p179 = scmp.eq.s32.totalorder %s28, 0
      %p180 = por %p178, %p179
      %s181 = sadd.s32 %s29, %s31
      %s182 = sadd.s32 %s48, %s40
      %s183 = ssub.s32 %s30, %s44
      %s184 = ssub.s32 %s181, %s182
      %s185 = sor.u32 %s183, %s184
      %p186 = scmp.eq.s32.totalorder %s185, 0
      %s188 = sadd.s32 %s187, 1
      %s189 = scalar_select %p186, %s187, %s188
      %p192 = pneg %p186
      %p193 = scmp.eq.s32.totalorder %s22, 1
      %p194 = por %p192, %p193
      %p195 = scmp.ne.s32.totalorder %s187, %s190
      %p196 = scmp.eq.s32.totalorder %s22, 0
      %p197 = por %p195, %p196
      %p198 = scmp.ne.s32.totalorder %s187, %s190
      %p199 = scmp.eq.s32.totalorder %s27, 1
      %p200 = por %p198, %p199
      %p201 = scmp.ne.s32.totalorder %s190, %s191
      %p202 = scmp.eq.s32.totalorder %s27, 0
      %p203 = por %p201, %p202
      %p204 = scmp.ne.s32.totalorder %s190, %s191
      %p205 = scmp.eq.s32.totalorder %s28, 1
      %p206 = por %p204, %p205
      %p208 = scmp.ne.s32.totalorder %s191, %s207
      %p209 = scmp.eq.s32.totalorder %s28, 0
      %p210 = por %p208, %p209
      %s211 = ssub.s32 %s30, %s44
      %s212 = ssub.s32 %s29, %s48
      %s213 = sor.u32 %s211, %s212
      %p214 = scmp.eq.s32.totalorder %s213, 0
      %s216 = sadd.s32 %s215, 1
      %s217 = scalar_select %p214, %s215, %s216
      %p220 = pneg %p214
      %p221 = scmp.eq.s32.totalorder %s22, 1
      %p222 = por %p220, %p221
      %p223 = scmp.ne.s32.totalorder %s215, %s218
      %p224 = scmp.eq.s32.totalorder %s22, 0
      %p225 = por %p223, %p224
      %p226 = scmp.ne.s32.totalorder %s215, %s218
      %p227 = scmp.eq.s32.totalorder %s27, 1
      %p228 = por %p226, %p227
      %p229 = scmp.ne.s32.totalorder %s218, %s219
      %p230 = scmp.eq.s32.totalorder %s27, 0
      %p231 = por %p229, %p230
      %p232 = scmp.ne.s32.totalorder %s218, %s219
      %p233 = scmp.eq.s32.totalorder %s28, 1
      %p234 = por %p232, %p233
      %p236 = scmp.ne.s32.totalorder %s219, %s235
      %p237 = scmp.eq.s32.totalorder %s28, 0
      %p238 = por %p236, %p237
      %p239 = scmp.le.s32.totalorder 1, %s22
      %p240 = scmp.lt.s32.totalorder %s22, 3
      %p241 = pnand %p239, %p240
      %p242 = pneg %p241
      // Predicated region
      $region9: #{tpu_custom_call.1} parent=5 // pred_check
        _
      $region10: #{tpu_custom_call.1} parent=5 // pred_check_branch
        %244 = sbr.rel (%p241) target = $region12
      $region11: #{tpu_custom_call.1} parent=5 // pred_region
        %s245 = ssub.s32 %s22, 1
        // Predicated region
        $region13: #{tpu_custom_call.1} parent=11 // pred_check
          %p246 = pneg %p92
        $region14: #{tpu_custom_call.1} parent=11 // pred_check_branch
          %248 = sbr.rel (%p246) target = $region16
        $region15: #{tpu_custom_call.1} parent=11 // pred_region
          _
        $region16: #{tpu_custom_call.1} parent=11 // pred_fallthru
          _
        // Predicated region
        $region17: #{tpu_custom_call.1} parent=11 // pred_check
          %p249 = pneg %p113
        $region18: #{tpu_custom_call.1} parent=11 // pred_check_branch
          %251 = sbr.rel (%p249) target = $region20
        $region19: #{tpu_custom_call.1} parent=11 // pred_region
          _
        $region20: #{tpu_custom_call.1} parent=11 // pred_fallthru
          _
      $region12: #{tpu_custom_call.1} parent=5 // pred_fallthru
        _
      %p252 = scmp.lt.s32.totalorder %s22, 2
      // Predicated region
      $region21: #{tpu_custom_call.1} parent=5 // pred_check
        %p253 = pneg %p252
      $region22: #{tpu_custom_call.1} parent=5 // pred_check_branch
        %255 = sbr.rel (%p253) target = $region24
      $region23: #{tpu_custom_call.1} parent=5 // pred_region
        // Predicated region
        $region25: #{tpu_custom_call.1} parent=23 // pred_check
          %p256 = pneg %p65
        $region26: #{tpu_custom_call.1} parent=23 // pred_check_branch
          %258 = sbr.rel (%p256) target = $region28
        $region27: #{tpu_custom_call.1} parent=23 // pred_region
          %s259 = sand.u32 %s55, 1
          %s260 = scalar_lea.sflag [#allocation4], %s259
          %s261 = sand.u32 %s55, 1
          %s262 = smul.addr %s261, 16
          %s263 = scalar_lea.vmem [#allocation3], %s262
          %s264 = sadd.s32 %s29, %s31
          %s266 = ssub.s32 256, 256
          %267 = vsyncadd %s260, %s266
          %s268 = smul.addr %s30, 4
          %s269 = sadd.s32 %s264, %s268
          %s270 = smul.addr %s269, 64
          %s271 = scalar_lea.hbm %s0, %s270
          %s272 = sshll.u32 %s263, 4
          %s273 = int_to_ptr.vmem [resolvable:$true] %s272
          %278 = dma.hbm_to_vmem [thread:$0]  %s271, 256, %s273, %s260, 64, 64, 4
        $region28: #{tpu_custom_call.1} parent=23 // pred_fallthru
          _
      $region24: #{tpu_custom_call.1} parent=5 // pred_fallthru
        _
      %p279 = scmp.le.s32.totalorder 1, %s22
      %p280 = scmp.lt.s32.totalorder %s22, 3
      %p281 = pnand %p279, %p280
      %p282 = pneg %p281
      // Predicated region
      $region29: #{tpu_custom_call.1} parent=5 // pred_check
        _
      $region30: #{tpu_custom_call.1} parent=5 // pred_check_branch
        %284 = sbr.rel (%p281) target = $region32
      $region31: #{tpu_custom_call.1} parent=5 // pred_region
        %s285 = ssub.s32 %s22, 1
        %s286 = sand.u32 %s58, 1
        %s287 = scalar_lea.sflag [#allocation4], %s286
        %s288 = sand.u32 %s58, 1
        %s289 = smul.addr %s288, 16
        %s290 = scalar_lea.vmem [#allocation3], %s289
        // Predicated region
        $region33: #{tpu_custom_call.1} parent=31 // pred_check
          %p291 = pneg %p71
        $region34: #{tpu_custom_call.1} parent=31 // pred_check_branch
          %293 = sbr.rel (%p291) target = $region36
        $region35: #{tpu_custom_call.1} parent=31 // pred_region
          %294 = dma.done %s287, 256
        $region36: #{tpu_custom_call.1} parent=31 // pred_fallthru
          _
        %s295 = sand.u32 %s58, 1
        %s296 = scalar_lea.sflag [#allocation4], %s295
        %s297 = sand.u32 %s58, 1
        %s298 = smul.addr %s297, 16
        %s299 = scalar_lea.vmem [#allocation3], %s298
        %p300 = pneg %p71
        %p301 = pneg %p68
        %p302 = pneg %p92
        %p303 = pneg %p89
        %p304 = pneg %p113
        %p305 = pneg %p110
        %p306 = pneg %p143
        %p307 = pneg %p140
        %s308 = sand.u32 %s130, 1
        %s309 = scalar_lea.sflag [#allocation5], %s308
        %s310 = sand.u32 %s130, 1
        %s311 = smul.addr %s310, 8
        %s312 = scalar_lea.vmem [#allocation6], %s311
        %p313 = pneg %p173
        %p314 = pneg %p170
        %s315 = sadd.s32 %s32, %s34
        %p316 = scmp.lt.s32.totalorder %s33, 1
        %s317 = scalar_select %p316, %s33, 1
        %p318 = scmp.lt.s32.totalorder %s315, 0
        %s319 = scalar_select %p318, %s315, 0
        %s320 = sadd.s32 %s319, %s317
        %s321 = scalar_lea.vmem %s4, %s320
        %p322 = pneg %p203
        %p323 = pneg %p200
        %s324 = sand.u32 %s190, 1
        %s325 = scalar_lea.sflag [#allocation8], %s324
        %s326 = sand.u32 %s190, 1
        %s327 = smul.addr %s326, 8
        %s328 = scalar_lea.vmem [#allocation7], %s327
        %p329 = pneg %p231
        %p330 = pneg %p228
        %p331 = scmp.lt.s32.totalorder %s33, 1
        %s332 = scalar_select %p331, %s33, 1
        %p333 = scmp.lt.s32.totalorder %s32, 0
        %s334 = scalar_select %p333, %s32, 0
        %s335 = smul.addr %s334, 4
        %s336 = smul.addr %s332, 4
        %s337 = sadd.s32 %s335, %s336
        %s338 = smul.addr %s337, 8
        %s339 = scalar_lea.vmem %s6, %s338
        %s340 = sadd.s32 %s32, %s34
        %s341 = sadd.s32 %s32, %s34
        %s342 = sadd.s32 %s32, %s34
        %p343 = scmp.lt.s32.totalorder %s33, 1
        %s344 = scalar_select %p343, %s33, 1
        %p345 = scmp.lt.s32.totalorder %s342, 0
        %s346 = scalar_select %p345, %s342, 0
        %s347 = sadd.s32 %s346, %s344
        %s348 = scalar_lea.vmem %s4, %s347
        %s349 = sadd.s32 %s32, %s34
        %s350 = sadd.s32 %s32, %s34
        %p351 = scmp.lt.s32.totalorder %s33, 1
        %s352 = scalar_select %p351, %s33, 1
        %p353 = scmp.lt.s32.totalorder %s32, 0
        %s354 = scalar_select %p353, %s32, 0
        %s355 = smul.addr %s354, 4
        %s356 = smul.addr %s352, 4
        %s357 = sadd.s32 %s355, %s356
        %s358 = smul.addr %s357, 8
        %s359 = scalar_lea.vmem %s6, %s358
        %v361 = vld [vmem:[%s290] sm:$0xf]
        %v362 = vld [vmem:[%s290 + $0x4] sm:$0xf]
        %v363 = vld [vmem:[%s290 + $0x8] sm:$0xf]
        %v364 = vld [vmem:[%s290 + $0xc] sm:$0xf]
        %v365 = vld [vmem:[%s1] sm:$0xf]
        %v366 = vld [vmem:[%s1 + $0x4] sm:$0xf]
        %v367 = vld [vmem:[%s1 + $0x8] sm:$0xf]
        %v368 = vld [vmem:[%s2] sm:$0xff]
        %v369 = vld [vmem:[%s2 + $0x8] sm:$0xff]
        %v370 = vld [vmem:[%s2 + $0x10] sm:$0xff]
        %372 = vset.pattern.permute.xlu0 0
        %373 = vperm.xlu0 %372, %v368
        %v374 = vpop.permute.xlu0 %373
        %377 = vset.pattern.permute.xlu0 0
        %378 = vperm.xlu0 %377, %v369
        %v379 = vpop.permute.xlu0 %378
        %382 = vset.pattern.permute.xlu0 0
        %383 = vperm.xlu0 %382, %v370
        %v384 = vpop.permute.xlu0 %383
        %v389 = vunpack.c.l.b16 %v365
        %v390 = vunpack.c.l.b16 %v366
        %v391 = vunpack.c.l.b16 %v367
        %v392 = vpack.c.b16 %v390, %v389
        %v393 = vpack.c.b16 %v391, %v391
        %v398 = vunpack.c.l.b16 %v361
        %v399 = vunpack.c.l.b16 %v362
        %v400 = vunpack.c.l.b16 %v363
        %v401 = vunpack.c.l.b16 %v364
        %v402 = vpack.c.b16 %v399, %v398
        %v403 = vpack.c.b16 %v401, %v400
        %vm406 = vcmask 261120
        %v408 = vsel %vm406, %v392, 0
        %v411 = vsel %vm406, %v393, 0
        %413 = vmatprep.subr.bf16.mxu0 0
        %414 = vmatpush1.bf16.msra.mxu0 0
        %415 = vmatprep.subr.bf16.mxu0 0
        %416 = vmatpush1.bf16.msra.mxu0 0
        %417 = vmatprep.subr.bf16.mxu0 0
        %418 = vmatpush1.bf16.msra.mxu0 0
        %419 = vmatprep.subr.bf16.mxu0 0
        %420 = vmatpush1.bf16.msra.mxu0 0
        %421 = vmatprep.subr.bf16.mxu0 0
        %422 = vmatpush1.bf16.msra.mxu0 0
        %423 = vmatprep.subr.bf16.mxu0 0
        %424 = vmatpush1.bf16.msra.mxu0 0
        %425 = vmatprep.subr.bf16.mxu0 0
        %426 = vmatpush1.bf16.msra.mxu0 %v403
        %427 = vmatprep.subr.bf16.mxu0 0
        %428 = vmatpush1.bf16.msra.mxu0 %v402
        %429 = vmatprep.subr.bf16.mxu0 0
        %430 = vmatpush2.bf16.msra.mxu0 0
        %431 = vmatprep.subr.bf16.mxu0 0
        %432 = vmatpush2.bf16.msra.mxu0 0
        %433 = vmatprep.subr.bf16.mxu0 0
        %434 = vmatpush2.bf16.msra.mxu0 0
        %435 = vmatprep.subr.bf16.mxu0 0
        %436 = vmatpush2.bf16.msra.mxu0 0
        %437 = vmatprep.subr.bf16.mxu0 0
        %438 = vmatpush2.bf16.msra.mxu0 0
        %439 = vmatprep.subr.bf16.mxu0 0
        %440 = vmatpush2.bf16.msra.mxu0 0
        %441 = vmatprep.subr.bf16.mxu0 0
        %442 = vmatpush2.bf16.msra.mxu0 0
        %443 = vmatprep.subr.bf16.mxu0 0
        %444 = vmatpush2.bf16.msra.mxu0 0
        %445 = vmatprep.mubr.bf16.mxu0 0
        %446 = vmatmul.mubr.bf16.gmra.mxu0 %v408
        %v447 = vpop.f32.mrf.mxu0
        %v448 = vadd.f32 %v374, %v447
        %v449 = vpop.f32.mrf.mxu0
        %v450 = vpop.f32.mrf.mxu0
        %v451 = vadd.f32 %v379, %v450
        %v452 = vpop.f32.mrf.mxu0
        %453 = vmatprep.mubr.bf16.mxu0 0
        %454 = vmatmul.mubr.bf16.gmra.mxu0 %v411
        %v455 = vpop.f32.mrf.mxu0
        %v456 = vadd.f32 %v384, %v455
        %v457 = vpop.f32.mrf.mxu0
        %v458 = vpop.f32.mrf.mxu0
        %v459 = vpop.f32.mrf.mxu0
        %460 = vdwg.mxu0
        %v461 = vxor.u32 %v456, 2147483648
        %v462 = vmul.f32 %v461, 1.442695
        %v463 = vpow.pop %v462
        %v464 = vadd.f32 %v463, 1.0
        %v465 = vrcp.pop %v464
        %v466 = vmul.f32 1.0, %v465
        %v467 = vlaneseq
        %v468 = vshrl.u32 %v467, 7
        %v469 = vsub.s32 0, %v468
        %v470 = vrot.slane %v466, %v469
        %v471 = vmul.f32 %v448, %v470
        %v472 = vmul.f32 %v451, %v470
        %v473 = vpack.c.bf16 %v451, %v448
        %v475 = vunpack.c.l.b16 %v473
        %v476 = vunpack.c.h.b16 %v473
        %v477 = vpack.c.b16 %v475, %v475
        %v478 = vpack.c.b16 %v476, %v476
        %481 = vst [vmem:[%s312] sm:$0xf] %v477
        %482 = vst [vmem:[%s312 + $0x4] sm:$0xf] %v478
        %v483 = vpack.c.bf16 %v466, %v466
        %vm484 = vcmask 1040384
        %vm485 = vsmask.f32 256
        %vm486 = vmand %vm484, %vm485
        %v487 = vld [vmem:[%s348] sm:$0x1]
        %v488 = vsel %vm486, %v483, %v487
        %489 = vst [vmem:[%s348] sm:$0x1] %v488
        %v490 = vpack.c.bf16 %v472, %v471
        %v492 = vunpack.c.l.b16 %v490
        %v493 = vunpack.c.h.b16 %v490
        %v494 = vpack.c.b16 %v492, %v492
        %v495 = vpack.c.b16 %v493, %v493
        %498 = vst [vmem:[%s328] sm:$0xf] %v494
        %499 = vst [vmem:[%s328 + $0x4] sm:$0xf] %v495
        %p500 = scmp.eq.s32.totalorder %s34, 0
        // Predicated region
        $region37: #{tpu_custom_call.1} parent=31 // pred_check
          %p501 = pneg %p500
        $region38: #{tpu_custom_call.1} parent=31 // pred_check_branch
          %503 = sbr.rel (%p501) target = $region40
        $region39: #{tpu_custom_call.1} parent=31 // pred_region
          %504 = vst [vmem:[#allocation2] sm:$0xff] 0.0
          %505 = vst [vmem:[#allocation2 + $0x8] sm:$0xff] 0.0
          %506 = vst [vmem:[#allocation2 + $0x10] sm:$0xff] 0.0
          %507 = vst [vmem:[#allocation2 + $0x18] sm:$0xff] 0.0
        $region40: #{tpu_custom_call.1} parent=31 // pred_fallthru
          _
        %v508 = vunpack.c.l.bf16 %v361
        %v509 = vunpack.c.l.bf16 %v362
        %v510 = vunpack.c.l.bf16 %v363
        %v511 = vunpack.c.l.bf16 %v364
        %v512 = vmax.f32 %v508, 1e-06
        %v513 = vmax.f32 %v509, 1e-06
        %v514 = vmax.f32 %v510, 1e-06
        %v515 = vmax.f32 %v511, 1e-06
        %v516 = vmul.f32 %v512, %v512
        %v517 = vmul.f32 %v513, %v513
        %v518 = vmul.f32 %v514, %v514
        %v519 = vmul.f32 %v515, %v515
        %v520 = vmul.f32 %v516, %v512
        %v521 = vmul.f32 %v517, %v513
        %v522 = vmul.f32 %v518, %v514
        %v523 = vmul.f32 %v519, %v515
        %v524 = vld [vmem:[#allocation2] sm:$0xff]
        %v525 = vld [vmem:[#allocation2 + $0x8] sm:$0xff]
        %v526 = vld [vmem:[#allocation2 + $0x10] sm:$0xff]
        %v527 = vld [vmem:[#allocation2 + $0x18] sm:$0xff]
        %v528 = vadd.f32 %v524, %v520
        %v529 = vadd.f32 %v525, %v521
        %v530 = vadd.f32 %v526, %v522
        %v531 = vadd.f32 %v527, %v523
        %532 = vst [vmem:[#allocation2] sm:$0xff] %v528
        %533 = vst [vmem:[#allocation2 + $0x8] sm:$0xff] %v529
        %534 = vst [vmem:[#allocation2 + $0x10] sm:$0xff] %v530
        %535 = vst [vmem:[#allocation2 + $0x18] sm:$0xff] %v531
        // Predicated region
        $region41: #{tpu_custom_call.1} parent=31 // pred_check
          %p536 = pneg %p500
        $region42: #{tpu_custom_call.1} parent=31 // pred_check_branch
          %538 = sbr.rel (%p536) target = $region44
        $region43: #{tpu_custom_call.1} parent=31 // pred_region
          %v539 = vld [vmem:[#allocation2] sm:$0xff]
          %v540 = vld [vmem:[#allocation2 + $0x8] sm:$0xff]
          %v541 = vld [vmem:[#allocation2 + $0x10] sm:$0xff]
          %v542 = vld [vmem:[#allocation2 + $0x18] sm:$0xff]
          %543 = vadd.xlane.f32.xlu0 %v539
          %v544 = vpop.xlane.xlu0 %543
          %545 = vadd.xlane.f32.xlu0 %v540
          %v546 = vpop.xlane.xlu0 %545
          %547 = vadd.xlane.f32.xlu0 %v541
          %v548 = vpop.xlane.xlu0 %547
          %549 = vadd.xlane.f32.xlu0 %v542
          %v550 = vpop.xlane.xlu0 %549
          %v551 = vmul.f32 %v544, 0.012345679
          %v552 = vmul.f32 %v546, 0.012345679
          %v553 = vmul.f32 %v548, 0.012345679
          %v554 = vmul.f32 %v550, 0.012345679
          %vm555 = vcmask 7168
          %556 = vst.msk [vmem:[%s359] sm:$0xff] %vm555, %v551
          %557 = vst.msk [vmem:[%s359 + $0x8] sm:$0xff] %vm555, %v552
          %558 = vst.msk [vmem:[%s359 + $0x10] sm:$0xff] %vm555, %v553
          %559 = vst.msk [vmem:[%s359 + $0x18] sm:$0xff] %vm555, %v554
        $region44: #{tpu_custom_call.1} parent=31 // pred_fallthru
          _
        %s560 = sand.u32 %s130, 1
        %s561 = scalar_lea.sflag [#allocation5], %s560
        %s562 = sand.u32 %s130, 1
        %s563 = smul.addr %s562, 8
        %s564 = scalar_lea.vmem [#allocation6], %s563
        %s565 = sadd.s32 %s32, %s34
        %p566 = scmp.lt.s32.totalorder %s33, 1
        %s567 = scalar_select %p566, %s33, 1
        %p568 = scmp.lt.s32.totalorder %s565, 0
        %s569 = scalar_select %p568, %s565, 0
        %s570 = sadd.s32 %s569, %s567
        %s571 = scalar_lea.vmem %s4, %s570
        %s572 = sand.u32 %s190, 1
        %s573 = scalar_lea.sflag [#allocation8], %s572
        %s574 = sand.u32 %s190, 1
        %s575 = smul.addr %s574, 8
        %s576 = scalar_lea.vmem [#allocation7], %s575
        %p577 = scmp.lt.s32.totalorder %s33, 1
        %s578 = scalar_select %p577, %s33, 1
        %p579 = scmp.lt.s32.totalorder %s32, 0
        %s580 = scalar_select %p579, %s32, 0
        %s581 = smul.addr %s580, 4
        %s582 = smul.addr %s578, 4
        %s583 = sadd.s32 %s581, %s582
        %s584 = smul.addr %s583, 8
        %s585 = scalar_lea.vmem %s6, %s584
        // Predicated region
        $region45: #{tpu_custom_call.1} parent=31 // pred_check
          %p586 = pneg %p140
        $region46: #{tpu_custom_call.1} parent=31 // pred_check_branch
          %588 = sbr.rel (%p586) target = $region48
        $region47: #{tpu_custom_call.1} parent=31 // pred_region
          %s589 = sadd.s32 %s32, %s34
          %s591 = ssub.s32 128, 128
          %592 = vsyncadd %s561, %s591
          %s593 = smul.addr %s33, 2
          %s594 = sadd.s32 %s589, %s593
          %s595 = smul.addr %s594, 64
          %s596 = scalar_lea.hbm %s3, %s595
          %s597 = sshll.u32 %s564, 4
          %s598 = int_to_ptr.vmem [resolvable:$true] %s597
          %603 = dma.vmem_to_hbm [thread:$0]  %s598, 128, %s596, %s561, 64, 64, 4
        $region48: #{tpu_custom_call.1} parent=31 // pred_fallthru
          _
        // Predicated region
        $region49: #{tpu_custom_call.1} parent=31 // pred_check
          %p604 = pneg %p170
        $region50: #{tpu_custom_call.1} parent=31 // pred_check_branch
          %606 = sbr.rel (%p604) target = $region52
        $region51: #{tpu_custom_call.1} parent=31 // pred_region
          %s607 = sadd.s32 %s32, %s34
        $region52: #{tpu_custom_call.1} parent=31 // pred_fallthru
          _
        // Predicated region
        $region53: #{tpu_custom_call.1} parent=31 // pred_check
          %p608 = pneg %p200
        $region54: #{tpu_custom_call.1} parent=31 // pred_check_branch
          %610 = sbr.rel (%p608) target = $region56
        $region55: #{tpu_custom_call.1} parent=31 // pred_region
          %s611 = sadd.s32 %s32, %s34
          %s613 = ssub.s32 128, 128
          %614 = vsyncadd %s573, %s613
          %s615 = smul.addr %s33, 2
          %s616 = sadd.s32 %s611, %s615
          %s617 = smul.addr %s616, 64
          %s618 = scalar_lea.hbm %s5, %s617
          %s619 = sshll.u32 %s576, 4
          %s620 = int_to_ptr.vmem [resolvable:$true] %s619
          %625 = dma.vmem_to_hbm [thread:$0]  %s620, 128, %s618, %s573, 64, 64, 4
        $region56: #{tpu_custom_call.1} parent=31 // pred_fallthru
          _
        // Predicated region
        $region57: #{tpu_custom_call.1} parent=31 // pred_check
          %p626 = pneg %p228
        $region58: #{tpu_custom_call.1} parent=31 // pred_check_branch
          %628 = sbr.rel (%p626) target = $region60
        $region59: #{tpu_custom_call.1} parent=31 // pred_region
          _
        $region60: #{tpu_custom_call.1} parent=31 // pred_fallthru
          _
      $region32: #{tpu_custom_call.1} parent=5 // pred_fallthru
        _
      %p629 = scmp.le.s32.totalorder 2, %s22
      // Predicated region
      $region61: #{tpu_custom_call.1} parent=5 // pred_check
        %p630 = pneg %p629
      $region62: #{tpu_custom_call.1} parent=5 // pred_check_branch
        %632 = sbr.rel (%p630) target = $region64
      $region63: #{tpu_custom_call.1} parent=5 // pred_region
        %s633 = ssub.s32 %s22, 2
        // Predicated region
        $region65: #{tpu_custom_call.1} parent=63 // pred_check
          %p634 = pneg %p146
        $region66: #{tpu_custom_call.1} parent=63 // pred_check_branch
          %636 = sbr.rel (%p634) target = $region68
        $region67: #{tpu_custom_call.1} parent=63 // pred_region
          %s637 = sand.u32 %s131, 1
          %s638 = scalar_lea.sflag [#allocation5], %s637
          %s639 = sand.u32 %s131, 1
          %s640 = smul.addr %s639, 8
          %s641 = scalar_lea.vmem [#allocation6], %s640
          %642 = dma.done %s638, 128
        $region68: #{tpu_custom_call.1} parent=63 // pred_fallthru
          _
        // Predicated region
        $region69: #{tpu_custom_call.1} parent=63 // pred_check
          %p643 = pneg %p176
        $region70: #{tpu_custom_call.1} parent=63 // pred_check_branch
          %645 = sbr.rel (%p643) target = $region72
        $region71: #{tpu_custom_call.1} parent=63 // pred_region
          %s646 = sadd.s32 %s35, %s37
          %p647 = scmp.lt.s32.totalorder %s36, 1
          %s648 = scalar_select %p647, %s36, 1
          %p649 = scmp.lt.s32.totalorder %s646, 0
          %s650 = scalar_select %p649, %s646, 0
          %s651 = sadd.s32 %s650, %s648
          %s652 = scalar_lea.vmem %s4, %s651
        $region72: #{tpu_custom_call.1} parent=63 // pred_fallthru
          _
        // Predicated region
        $region73: #{tpu_custom_call.1} parent=63 // pred_check
          %p653 = pneg %p206
        $region74: #{tpu_custom_call.1} parent=63 // pred_check_branch
          %655 = sbr.rel (%p653) target = $region76
        $region75: #{tpu_custom_call.1} parent=63 // pred_region
          %s656 = sand.u32 %s191, 1
          %s657 = scalar_lea.sflag [#allocation8], %s656
          %s658 = sand.u32 %s191, 1
          %s659 = smul.addr %s658, 8
          %s660 = scalar_lea.vmem [#allocation7], %s659
          %661 = dma.done %s657, 128
        $region76: #{tpu_custom_call.1} parent=63 // pred_fallthru
          _
        // Predicated region
        $region77: #{tpu_custom_call.1} parent=63 // pred_check
          %p662 = pneg %p234
        $region78: #{tpu_custom_call.1} parent=63 // pred_check_branch
          %664 = sbr.rel (%p662) target = $region80
        $region79: #{tpu_custom_call.1} parent=63 // pred_region
          %p665 = scmp.lt.s32.totalorder %s36, 1
          %s666 = scalar_select %p665, %s36, 1
          %p667 = scmp.lt.s32.totalorder %s35, 0
          %s668 = scalar_select %p667, %s35, 0
          %s669 = smul.addr %s668, 4
          %s670 = smul.addr %s666, 4
          %s671 = sadd.s32 %s669, %s670
          %s672 = smul.addr %s671, 8
          %s673 = scalar_lea.vmem %s6, %s672
        $region80: #{tpu_custom_call.1} parent=63 // pred_fallthru
          _
      $region64: #{tpu_custom_call.1} parent=5 // pred_fallthru
        _
    $region6: #{tpu_custom_call.1} parent=1 // loop_footer
      %s26 = sadd.s32 1, %s22
    $region7: #{tpu_custom_call.1} parent=1 // loop_footer_branch
      %21 = sbr.rel target = $region3
    $region8: #{tpu_custom_call.1} parent=1 // loop_exit
      _
    %674 = vsyncpa [#allocation4], 1
    %s675 = scalar_lea.sflag [#allocation4], 1
    %676 = vsyncpa %s675, 1
    %677 = vsyncpa [#allocation5], 1
    %s678 = scalar_lea.sflag [#allocation5], 1
    %679 = vsyncpa %s678, 1
    %680 = vsyncpa [#allocation8], 1
    %s681 = scalar_lea.sflag [#allocation8], 1
    %682 = vsyncpa %s681, 1

</llo_original>
